<compile_context>
chip_gen: v6e
topology: v6e:2x2x1
jax: 0.10.0
libtpu: 0.0.40
codegen_flags: <defaults>
</compile_context>

<pallas_src>
import math

import jax
import jax.numpy as jnp
from jax.experimental import pallas as pl
from jax.experimental.pallas import tpu as pltpu


def _scale_kernel(x_ref, c_ref, o_ref):
    # x_ref: (RB, CB); c_ref: (RB, 1) or (1, CB) -> VPU broadcast multiply.
    o_ref[...] = x_ref[...] * c_ref[...]


def _pick_block(extent, unit, target):
    """Block size along one axis: full extent if small, else a multiple of `unit`."""
    if extent <= max(target, unit):
        return extent  # full-extent blocks are always legal
    return max(unit, (target // unit) * unit)


def multiply_by_constant(x, constant, dim_ix=1, *, xla_fallback_min_elems=0):
    """Pallas implementation of MultiplyByConstant.forward.

    `xla_fallback_min_elems` > 0 lets tiny (sub-VMEM) inputs bypass Pallas and use
    a plain XLA broadcast (the pallas_call fixed overhead dominates there). Default
    0 so the Pallas path always runs.
    """
    ndim = x.ndim
    dim_ix = dim_ix % ndim
    dim_size = constant.shape[0]
    if x.shape[dim_ix] != dim_size:
        raise ValueError(
            "The size of dimension {} is {} which is different than {}".format(
                dim_ix, x.shape[dim_ix], dim_size
            )
        )

    # Match PyTorch type promotion (e.g. bf16 x * f32 parameter -> f32).
    out_dtype = jnp.result_type(x.dtype, constant.dtype)

    if x.size < xla_fallback_min_elems:
        view = [dim_size if i == dim_ix else 1 for i in range(ndim)]
        return (x.astype(out_dtype) * constant.astype(out_dtype).reshape(view))

    shape = x.shape
    if dim_ix == ndim - 1:
        # Scaled dim is already the lane-dense last axis: constant varies along lanes.
        rows = math.prod(shape[:-1])
        cols = dim_size
        x2d = x.reshape(rows, cols).astype(out_dtype)
        c2d = constant.reshape(1, cols).astype(out_dtype)
        const_is_row = False
    else:
        # Reshape-only (no transpose): row r of (rows, cols) has channel r % C.
        pre = math.prod(shape[:dim_ix])          # product of dims before dim_ix
        rows = pre * dim_size
        cols = math.prod(shape[dim_ix + 1:])
        x2d = x.reshape(rows, cols).astype(out_dtype)
        c2d = jnp.tile(constant.astype(out_dtype), pre).reshape(rows, 1)
        const_is_row = True

    # Tile: sublane-full rows (multiple of 8), lane-dense cols (multiple of 128).
    # <= ~2 MiB per f32 block -> double-buffered working set well under scoped VMEM
    # on v5e/v6e (16/32 MiB) and v7x (64 MiB physical).
    rb = _pick_block(rows, 8, 512)
    cb = _pick_block(cols, 128, 1024)
    grid = (pl.cdiv(rows, rb), pl.cdiv(cols, cb))

    if const_is_row:
        # Block index only changes with the row grid index -> no per-inner-step DMA.
        c_spec = pl.BlockSpec((rb, 1), lambda ri, ci: (ri, 0))
    else:
        c_spec = pl.BlockSpec((1, cb), lambda ri, ci: (0, ci))

    itemsize = jnp.dtype(out_dtype).itemsize
    n = rows * cols
    cost = pl.CostEstimate(
        flops=n,
        transcendentals=0,
        bytes_accessed=2 * n * itemsize + c2d.size * itemsize,
    )

    out2d = pl.pallas_call(
        _scale_kernel,
        out_shape=jax.ShapeDtypeStruct((rows, cols), out_dtype),
        grid=grid,
        in_specs=[
            pl.BlockSpec((rb, cb), lambda ri, ci: (ri, ci)),
            c_spec,
        ],
        out_specs=pl.BlockSpec((rb, cb), lambda ri, ci: (ri, ci)),
        compiler_params=pltpu.CompilerParams(
            dimension_semantics=("parallel", "parallel"),
        ),
        cost_estimate=cost,
    )(x2d, c2d)

    return out2d.reshape(shape)


if __name__ == "__main__":
    key = jax.random.PRNGKey(0)
    B, C, H, W = 2, 4, 16, 16
    dim_ix = 1

    x = jax.random.normal(key, (B, C, H, W), dtype=jnp.float32)

    # Deterministic parameter init, matching torch.nn.Parameter(torch.ones(dim_size)).
    constant = jnp.ones((C,), dtype=jnp.float32)

    out = multiply_by_constant(x, constant, dim_ix=dim_ix)
    out = jax.block_until_ready(out)

    # Reference check (pure JAX broadcast).
    view = [C if i == dim_ix else 1 for i in range(x.ndim)]
    ref = x * constant.reshape(view)
    assert out.shape == x.shape
    assert out.dtype == ref.dtype
    assert jnp.allclose(out, ref, atol=1e-6, rtol=1e-6)

    # Also exercise the "scaled dim is last" path (uses the (1, C) column layout).
    x2 = jax.random.normal(jax.random.PRNGKey(1), (B, H, C), dtype=jnp.float32)
    c2 = jnp.linspace(0.5, 2.0, C, dtype=jnp.float32)
    out2 = jax.block_until_ready(multiply_by_constant(x2, c2, dim_ix=2))
    ref2 = x2 * c2.reshape(1, 1, C)
    assert jnp.allclose(out2, ref2, atol=1e-6, rtol=1e-6)

    print("KERNEL_OK")
</pallas_src>

<mosaic_0001>
module attributes {stable_mosaic.version = 11 : i64} {
  func.func @_scale_kernel(%arg0: i32, %arg1: i32, %arg2: memref<8x256xf32, #tpu.memory_space<vmem>>, %arg3: memref<8x1xf32, #tpu.memory_space<vmem>>, %arg4: memref<8x256xf32, #tpu.memory_space<vmem>>) attributes {dimension_semantics = [#tpu.dimension_semantics<parallel>, #tpu.dimension_semantics<parallel>], iteration_bounds = array<i64: 1, 1>, scalar_prefetch = 0 : i64, scratch_operands = 0 : i64, tpu.core_type = #tpu.core_type<tc>, window_params = [{transform_indices = @transform_0, window_bounds = array<i64: 8, 256>}, {transform_indices = @transform_1, window_bounds = array<i64: 8, 1>}, {transform_indices = @transform_2, window_bounds = array<i64: 8, 256>}]} {
    %c0 = arith.constant 0 : index
    %c0_0 = arith.constant 0 : index
    %0 = vector.load %arg2[%c0, %c0_0] : memref<8x256xf32, #tpu.memory_space<vmem>>, vector<8x256xf32>
    %c0_1 = arith.constant 0 : index
    %c0_2 = arith.constant 0 : index
    %1 = vector.load %arg3[%c0_1, %c0_2] : memref<8x1xf32, #tpu.memory_space<vmem>>, vector<8x1xf32>
    %2 = vector.broadcast %1 : vector<8x1xf32> to vector<8x256xf32>
    %3 = arith.mulf %0, %2 : vector<8x256xf32>
    %c0_3 = arith.constant 0 : index
    %c0_4 = arith.constant 0 : index
    %4 = vector.load %arg4[%c0_3, %c0_4] : memref<8x256xf32, #tpu.memory_space<vmem>>, vector<8x256xf32>
    tpu.vector_store %arg4[%c0_3, %c0_4], %3 {strides = array<i32>} : memref<8x256xf32, #tpu.memory_space<vmem>>, vector<8x256xf32>,
    return
  }
  func.func @transform_0(%arg0: i32, %arg1: i32) -> (i32, i32) {
    %c0_i32 = arith.constant 0 : i32
    return %arg0, %arg1 : i32, i32
  }
  func.func @transform_1(%arg0: i32, %arg1: i32) -> (i32, i32) {
    %c0_i32 = arith.constant 0 : i32
    %c0_i32_0 = arith.constant 0 : i32
    return %arg0, %c0_i32 : i32, i32
  }
  func.func @transform_2(%arg0: i32, %arg1: i32) -> (i32, i32) {
    %c0_i32 = arith.constant 0 : i32
    return %arg0, %arg1 : i32, i32
  }
}

</mosaic_0001>

<llo_original>
// kernel: tpu_custom_call.1
$region0: #{tpu_custom_call.1}
  #allocation0 [shape = 'u32[]', space=smem, size = 0x4, offset = 0x4, fixed_abs, tag = 'smem constant byte address 0x4 - core index']
  #allocation1 [shape = 'u32[144,128]{1,0:T(1,128)}', space=vmem, size = 0x12000, scoped, tag = 'internal scratch']
  %s0 = inlined_call_operand.hbm [shape: f32[8,256], index: 0, kind: input, shape index: {}]
  %s1 = inlined_call_operand.vmem [shape: f32[8,1], index: 1, kind: input, shape index: {}]
  %s2 = inlined_call_operand.hbm [shape: f32[8,256], index: 2, kind: output, shape index: {}]
  %s3 = sld [smem:[#allocation0]]
  $region22: #{tpu_custom_call.1} parent=0
    _
  %s5 = ssub.s32 1, %s3
  %s6 = scalar_select 0, %s5, %s3
  $region1: #{tpu_custom_call.1} parent=0
    #allocation2 [shape = 'u8[8192]{0}', space=vmem, size = 0x2000, scoped, tag = 'input window, operand 0, single buffered']
    #allocation3 [shape = 's32[1]{0}', space=sflag, size = 0x4, scoped, tag = 'scoped memory for tpu_custom_call.1']
    #allocation4 [shape = 's32[1]{0}', space=sflag, size = 0x4, scoped, tag = 'scoped memory for tpu_custom_call.1']
    #allocation5 [shape = 'u8[8192]{0}', space=vmem, size = 0x2000, scoped, tag = 'output window, operand 0, single buffered']
    %7 = vsyncpa [#allocation3], 0
    %8 = vsyncpa [#allocation4], 0
    // Predicated region
    $region2: #{tpu_custom_call.1} parent=1 // pred_check
      _
    $region3: #{tpu_custom_call.1} parent=1 // pred_check_branch
      %10 = sbr.rel (0) target = $region5
    $region4: #{tpu_custom_call.1} parent=1 // pred_region
      %s12 = ssub.s32 256, 256
      %13 = vsyncadd [#allocation3], %s12
      %s15 = sshll.u32 [#allocation2], 4
      %s16 = int_to_ptr.vmem [resolvable:$true] %s15
      %18 = dma.hbm_to_vmem [thread:$0]  %s0, 256, %s16, [#allocation3]
    $region5: #{tpu_custom_call.1} parent=1 // pred_fallthru
      _
    // Predicated region
    $region6: #{tpu_custom_call.1} parent=1 // pred_check
      _
    $region7: #{tpu_custom_call.1} parent=1 // pred_check_branch
      %20 = sbr.rel (0) target = $region9
    $region8: #{tpu_custom_call.1} parent=1 // pred_region
      _
    $region9: #{tpu_custom_call.1} parent=1 // pred_fallthru
      _
    // Predicated region
    $region10: #{tpu_custom_call.1} parent=1 // pred_check
      _
    $region11: #{tpu_custom_call.1} parent=1 // pred_check_branch
      %22 = sbr.rel (0) target = $region13
    $region12: #{tpu_custom_call.1} parent=1 // pred_region
      %23 = dma.done [#allocation3], 256
    $region13: #{tpu_custom_call.1} parent=1 // pred_fallthru
      _
    %v24 = vld [vmem:[#allocation2] sm:$0xff]
    %v25 = vld [vmem:[#allocation2 + $0x8] sm:$0xff]
    %v26 = vld [vmem:[%s1] sm:$0xff]
    %28 = vset.pattern.permute.xlu0 0
    %29 = vperm.xlu0 %28, %v26
    %v30 = vpop.permute.xlu0 %29
    %v32 = vmul.f32 %v24, %v30
    %v33 = vmul.f32 %v25, %v30
    %34 = vst [vmem:[#allocation5] sm:$0xff] %v32
    %35 = vst [vmem:[#allocation5 + $0x8] sm:$0xff] %v33
    // Predicated region
    $region14: #{tpu_custom_call.1} parent=1 // pred_check
      _
    $region15: #{tpu_custom_call.1} parent=1 // pred_check_branch
      %37 = sbr.rel (0) target = $region17
    $region16: #{tpu_custom_call.1} parent=1 // pred_region
      %s39 = ssub.s32 256, 256
      %40 = vsyncadd [#allocation4], %s39
      %s42 = sshll.u32 [#allocation5], 4
      %s43 = int_to_ptr.vmem [resolvable:$true] %s42
      %45 = dma.vmem_to_hbm [thread:$0]  %s43, 256, %s2, [#allocation4]
    $region17: #{tpu_custom_call.1} parent=1 // pred_fallthru
      _
    // Predicated region
    $region18: #{tpu_custom_call.1} parent=1 // pred_check
      _
    $region19: #{tpu_custom_call.1} parent=1 // pred_check_branch
      %47 = sbr.rel (0) target = $region21
    $region20: #{tpu_custom_call.1} parent=1 // pred_region
      %48 = dma.done [#allocation4], 256
    $region21: #{tpu_custom_call.1} parent=1 // pred_fallthru
      _
    %49 = vsyncpa [#allocation3], 1
    %50 = vsyncpa [#allocation4], 1

</llo_original>
